<compile_context>
chip_gen: v7x
topology: tpu7x:2x2x1
jax: 0.10.0
libtpu: 0.0.40
codegen_flags: <defaults>
</compile_context>

<pallas_src>
import jax
import jax.numpy as jnp
from jax import lax
from jax.experimental import pallas as pl
from jax.experimental.pallas import tpu as pltpu


# Double-buffered (in + out) working-set budget for the spatial tile.  Kept
# under the v5e 16 MiB scoped-VMEM default and well under v7x's 64 MiB
# physical VMEM; we additionally raise vmem_limit_bytes to 32 MiB below.
_VMEM_TILE_BUDGET_BYTES = 12 * 1024 * 1024
_VMEM_LIMIT_BYTES = 32 * 1024 * 1024


def _round_up(v, m):
    return -(-v // m) * m


def _pick_tile_hw(hw, c, c2, budget_bytes=_VMEM_TILE_BUDGET_BYTES):
    """Largest lane-dense (128-multiple) spatial tile that fits the VMEM budget.

    Accounts for sublane padding: the (1, C, T) / (1, C2, T) blocks occupy
    pad8(C) / pad8(C2) sublanes in VMEM, double-buffered by the pipeline.
    """
    pad8 = lambda v: _round_up(v, 8)
    bytes_per_col = (pad8(c) + pad8(c2)) * 4 * 2      # f32, double-buffered in+out
    cap = max(128, (budget_bytes // bytes_per_col) // 128 * 128)

    if hw <= cap:
        # Whole spatial extent in one block; full-extent blocks are always legal.
        return hw

    # Prefer the largest 128-multiple <= cap that divides hw exactly: every
    # tile is full and stores stay unmasked.
    t = cap
    while t >= 128:
        if hw % t == 0:
            return t
        t -= 128

    # No exact divisor: use the budget cap; Pallas masks only the last tile.
    return cap


def _vp_kernel_vpu(x_ref, w_ref, o_ref):
    """Vectorized VPU path for tiny channel counts.

    x_ref: (1, C, T)  VMEM f32   -- spatial (T) on the lane axis
    w_ref: (C2, C)    VMEM f32   -- 1x1 ConvTranspose2d weights (transposed)
    o_ref: (1, C2, T) VMEM f32

    One broadcast FMA over the full (C2, T) tile per input channel: C dense
    full-vreg FMAs, straight full-tile store, no sublane concatenate.
    """
    c = x_ref.shape[1]
    x = jnp.maximum(x_ref[0], 0.0)                    # ReLU on the VPU, (C, T)
    w = w_ref[...]                                    # (C2, C)
    acc = w[:, 0:1] * x[0:1, :]                       # (C2, T)
    for ci in range(1, c):
        acc = acc + w[:, ci:ci + 1] * x[ci:ci + 1, :]
    o_ref[0] = acc.astype(o_ref.dtype)


def _vp_kernel_mxu(x_ref, w_ref, o_ref):
    """MXU path for larger channel counts (free filler; kernel is mem-bound).

    x_ref: (1, C, T) VMEM; w_ref: (C2, C) VMEM; o_ref: (1, C2, T) VMEM.
    MXU output N-dim is the lane-dense spatial dim T.
    """
    x = jnp.maximum(x_ref[0], 0.0)                    # (C, T)
    o_ref[0] = jnp.dot(
        w_ref[...], x,
        preferred_element_type=jnp.float32,
        precision=lax.Precision.HIGHEST,
    ).astype(o_ref.dtype)


def variance_projector(x_nchw, weight_ct2d, *, tile_hw=None, mxu_channel_threshold=8):
    """ReLU -> 1x1 ConvTranspose2d(C, 2C, bias=False), NCHW in / NCHW out.

    x_nchw:      (N, C, H, W) float32
    weight_ct2d: (C, 2C, 1, 1) float32 (PyTorch ConvTranspose2d weight layout)
    returns:     (N, 2C, H, W) float32
    """
    N, C, H, W = x_nchw.shape
    C2 = weight_ct2d.shape[1]
    assert weight_ct2d.shape == (C, C2, 1, 1)

    HW = H * W
    # NCHW -> (N, C, H*W): contiguous reshape, no HBM transpose on either side.
    x3 = x_nchw.reshape(N, C, HW)
    # (C, C2, 1, 1) -> (C2, C): tiny one-time host-side transpose.
    w_arg = weight_ct2d.reshape(C, C2).T

    if tile_hw is None:
        tile_hw = _pick_tile_hw(HW, C, C2)
    else:
        if tile_hw >= HW:
            tile_hw = HW
        else:
            tile_hw = max(128, (tile_hw // 128) * 128)   # keep lane-dense tiles

    num_t = pl.cdiv(HW, tile_hw)
    # Spatial axis leads so megacore sharding on v7x splits the large axis
    # even when N == 1.  Both axes are independent ("parallel").
    grid = (num_t, N)

    x_spec = pl.BlockSpec((1, C, tile_hw), lambda t, n: (n, 0, t))
    w_spec = pl.BlockSpec((C2, C), lambda t, n: (0, 0))   # constant block, no re-DMA
    o_spec = pl.BlockSpec((1, C2, tile_hw), lambda t, n: (n, 0, t))

    kernel = _vp_kernel_vpu if C <= mxu_channel_threshold else _vp_kernel_mxu

    # Mem-bound op: ~f32 in + f32 out per pixel.
    cost = pl.CostEstimate(
        flops=2 * N * HW * C * C2 + N * HW * C,
        transcendentals=0,
        bytes_accessed=4 * (N * HW * (C + C2) + C * C2),
    )

    out3 = pl.pallas_call(
        kernel,
        out_shape=jax.ShapeDtypeStruct((N, C2, HW), x_nchw.dtype),
        grid=grid,
        in_specs=[x_spec, w_spec],
        out_specs=o_spec,
        compiler_params=pltpu.CompilerParams(
            dimension_semantics=("parallel", "parallel"),
            vmem_limit_bytes=_VMEM_LIMIT_BYTES,
        ),
        cost_estimate=cost,
    )(x3, w_arg)

    return out3.reshape(N, C2, H, W)


if __name__ == "__main__":
    key = jax.random.PRNGKey(0)

    def ref_fn(x, w):
        c, c2 = w.shape[0], w.shape[1]
        return jnp.einsum("nchw,cd->ndhw", jnp.maximum(x, 0.0), w.reshape(c, c2))

    # Case 1: module-sized conv branch (output_shape=[4,16,16] -> 2C=8 channels),
    # VPU path, HW divisible by 128 -> single full lane-dense tile.
    N, C, H, W = 2, 4, 16, 16
    kx, kw = jax.random.split(key)
    x = jax.random.normal(kx, (N, C, H, W), dtype=jnp.float32)
    w = jax.random.normal(kw, (C, 2 * C, 1, 1), dtype=jnp.float32) * (1.0 / jnp.sqrt(C))
    y = jax.block_until_ready(variance_projector(x, w))
    assert y.shape == (N, 2 * C, H, W)
    assert jnp.allclose(y, ref_fn(x, w), atol=1e-5, rtol=1e-5)

    # Case 2: MXU path (C above the threshold).
    N2, Cb, H2, W2 = 1, 16, 16, 16
    kx2, kw2 = jax.random.split(kw)
    x2 = jax.random.normal(kx2, (N2, Cb, H2, W2), dtype=jnp.float32)
    w2 = jax.random.normal(kw2, (Cb, 2 * Cb, 1, 1), dtype=jnp.float32) * (1.0 / jnp.sqrt(Cb))
    y2 = jax.block_until_ready(variance_projector(x2, w2))
    assert jnp.allclose(y2, ref_fn(x2, w2), atol=1e-4, rtol=1e-4)

    # Case 3: non-divisible HW (24*24 = 576) with an explicit small tile ->
    # multi-tile grid where only the last tile is masked.
    N3, C3, H3, W3 = 2, 4, 24, 24
    kx3, kw3 = jax.random.split(kw2)
    x3 = jax.random.normal(kx3, (N3, C3, H3, W3), dtype=jnp.float32)
    w3 = jax.random.normal(kw3, (C3, 2 * C3, 1, 1), dtype=jnp.float32) * (1.0 / jnp.sqrt(C3))
    y3 = jax.block_until_ready(variance_projector(x3, w3, tile_hw=128))
    assert jnp.allclose(y3, ref_fn(x3, w3), atol=1e-5, rtol=1e-5)

    print("KERNEL_OK")
</pallas_src>

<mosaic_0001>
module attributes {stable_mosaic.version = 11 : i64} {
  func.func @_vp_kernel_vpu(%arg0: i32, %arg1: i32, %arg2: memref<1x4x256xf32, #tpu.memory_space<vmem>>, %arg3: memref<8x4xf32, #tpu.memory_space<vmem>>, %arg4: memref<1x8x256xf32, #tpu.memory_space<vmem>>) attributes {dimension_semantics = [#tpu.dimension_semantics<parallel>, #tpu.dimension_semantics<parallel>], iteration_bounds = array<i64: 1, 2>, scalar_prefetch = 0 : i64, scratch_operands = 0 : i64, tpu.core_type = #tpu.core_type<tc>, window_params = [{transform_indices = @transform_0, window_bounds = array<i64: 1, 4, 256>}, {pipeline_mode = #tpu.pipeline_mode<synchronous>, transform_indices = @transform_1, window_bounds = array<i64: 8, 4>}, {transform_indices = @transform_2, window_bounds = array<i64: 1, 8, 256>}]} {
    %c0 = arith.constant 0 : index
    %c0_0 = arith.constant 0 : index
    %c0_1 = arith.constant 0 : index
    %0 = vector.load %arg2[%c0, %c0_0, %c0_1] : memref<1x4x256xf32, #tpu.memory_space<vmem>>, vector<1x4x256xf32>
    %1 = vector.shape_cast %0 : vector<1x4x256xf32> to vector<4x256xf32>
    %cst = arith.constant 0.000000e+00 : f32
    %2 = vector.broadcast %cst : f32 to vector<4x256xf32>
    %3 = arith.maximumf %1, %2 : vector<4x256xf32>
    %c0_2 = arith.constant 0 : index
    %c0_3 = arith.constant 0 : index
    %4 = vector.load %arg3[%c0_2, %c0_3] : memref<8x4xf32, #tpu.memory_space<vmem>>, vector<8x4xf32>
    %5 = vector.extract_strided_slice %4 {offsets = [0, 0], sizes = [8, 1], strides = [1, 1]} : vector<8x4xf32> to vector<8x1xf32>
    %6 = vector.extract_strided_slice %3 {offsets = [0, 0], sizes = [1, 256], strides = [1, 1]} : vector<4x256xf32> to vector<1x256xf32>
    %7 = vector.broadcast %5 : vector<8x1xf32> to vector<8x256xf32>
    %8 = vector.broadcast %6 : vector<1x256xf32> to vector<8x256xf32>
    %9 = arith.mulf %7, %8 : vector<8x256xf32>
    %10 = vector.extract_strided_slice %4 {offsets = [0, 1], sizes = [8, 1], strides = [1, 1]} : vector<8x4xf32> to vector<8x1xf32>
    %11 = vector.extract_strided_slice %3 {offsets = [1, 0], sizes = [1, 256], strides = [1, 1]} : vector<4x256xf32> to vector<1x256xf32>
    %12 = vector.broadcast %10 : vector<8x1xf32> to vector<8x256xf32>
    %13 = vector.broadcast %11 : vector<1x256xf32> to vector<8x256xf32>
    %14 = arith.mulf %12, %13 : vector<8x256xf32>
    %15 = arith.addf %9, %14 : vector<8x256xf32>
    %16 = vector.extract_strided_slice %4 {offsets = [0, 2], sizes = [8, 1], strides = [1, 1]} : vector<8x4xf32> to vector<8x1xf32>
    %17 = vector.extract_strided_slice %3 {offsets = [2, 0], sizes = [1, 256], strides = [1, 1]} : vector<4x256xf32> to vector<1x256xf32>
    %18 = vector.broadcast %16 : vector<8x1xf32> to vector<8x256xf32>
    %19 = vector.broadcast %17 : vector<1x256xf32> to vector<8x256xf32>
    %20 = arith.mulf %18, %19 : vector<8x256xf32>
    %21 = arith.addf %15, %20 : vector<8x256xf32>
    %22 = vector.extract_strided_slice %4 {offsets = [0, 3], sizes = [8, 1], strides = [1, 1]} : vector<8x4xf32> to vector<8x1xf32>
    %23 = vector.extract_strided_slice %3 {offsets = [3, 0], sizes = [1, 256], strides = [1, 1]} : vector<4x256xf32> to vector<1x256xf32>
    %24 = vector.broadcast %22 : vector<8x1xf32> to vector<8x256xf32>
    %25 = vector.broadcast %23 : vector<1x256xf32> to vector<8x256xf32>
    %26 = arith.mulf %24, %25 : vector<8x256xf32>
    %27 = arith.addf %21, %26 : vector<8x256xf32>
    %c0_4 = arith.constant 0 : index
    %c0_5 = arith.constant 0 : index
    %c0_6 = arith.constant 0 : index
    %28 = vector.load %arg4[%c0_4, %c0_5, %c0_6] : memref<1x8x256xf32, #tpu.memory_space<vmem>>, vector<1x8x256xf32>
    %29 = vector.shape_cast %28 : vector<1x8x256xf32> to vector<8x256xf32>
    %30 = vector.shape_cast %27 : vector<8x256xf32> to vector<1x8x256xf32>
    tpu.vector_store %arg4[%c0_4, %c0_5, %c0_6], %30 {strides = array<i32>} : memref<1x8x256xf32, #tpu.memory_space<vmem>>, vector<1x8x256xf32>,
    return
  }
  func.func @transform_0(%arg0: i32, %arg1: i32) -> (i32, i32, i32) {
    %c0_i32 = arith.constant 0 : i32
    %c0_i32_0 = arith.constant 0 : i32
    return %arg1, %c0_i32, %arg0 : i32, i32, i32
  }
  func.func @transform_1(%arg0: i32, %arg1: i32) -> (i32, i32) {
    %c0_i32 = arith.constant 0 : i32
    %c0_i32_0 = arith.constant 0 : i32
    %c0_i32_1 = arith.constant 0 : i32
    return %c0_i32, %c0_i32_0 : i32, i32
  }
  func.func @transform_2(%arg0: i32, %arg1: i32) -> (i32, i32, i32) {
    %c0_i32 = arith.constant 0 : i32
    %c0_i32_0 = arith.constant 0 : i32
    return %arg1, %c0_i32, %arg0 : i32, i32, i32
  }
}

</mosaic_0001>

<llo_original>
// kernel: tpu_custom_call.1
$region0: #{tpu_custom_call.1}
  #allocation0 [shape = 'u32[]', space=smem, size = 0x4, offset = 0x4, fixed_abs, tag = 'smem constant byte address 0x4 - core index']
  #allocation1 [shape = 'u32[144,128]{1,0:T(1,128)}', space=vmem, size = 0x12000, scoped, tag = 'internal scratch']
  %s0 = inlined_call_operand.hbm [shape: f32[2,4,256], index: 0, kind: input, shape index: {}]
  %s1 = inlined_call_operand.vmem [shape: f32[8,4], index: 1, kind: input, shape index: {}]
  %s2 = inlined_call_operand.hbm [shape: f32[2,8,256], index: 2, kind: output, shape index: {}]
  %s3 = sld [smem:[#allocation0]]
  $region45: #{tpu_custom_call.1} parent=0
    _
  %s5 = ssub.s32 1, %s3
  %s6 = scalar_select 0, %s5, %s3
  $region1: #{tpu_custom_call.1} parent=0
    #allocation2 [shape = 'u8[8192]{0}', space=vmem, size = 0x2000, scoped, tag = 'input window, operand 0']
    #allocation3 [shape = 's32[2]{0}', space=sflag, size = 0x8, scoped, tag = 'scoped memory for tpu_custom_call.1']
    #allocation4 [shape = 's32[2]{0}', space=sflag, size = 0x8, scoped, tag = 'scoped memory for tpu_custom_call.1']
    #allocation5 [shape = 'u8[16384]{0}', space=vmem, size = 0x4000, scoped, tag = 'output window, operand 0']
    %7 = vsyncpa [#allocation3], 0
    %s8 = scalar_lea.sflag [#allocation3], 1
    %9 = vsyncpa %s8, 0
    %10 = vsyncpa [#allocation4], 0
    %s11 = scalar_lea.sflag [#allocation4], 1
    %12 = vsyncpa %s11, 0
    loop: start=0, step=1, limit=4
    $region2: #{tpu_custom_call.1} parent=1 // loop_pre_header
      _
    $region3: #{tpu_custom_call.1} parent=1 // loop_header
      %s14 = sphi 0, %s18
      %p15 = scmp.ge.s32.totalorder %s14, 4
      %s21 = sphi 0, %s33
      %s22 = sphi 0, %s29
      %s23 = sphi 0, %s21
      %s24 = sphi 0, %s22
      %s25 = sphi 0, %s23
      %s26 = sphi 0, %s24
      %s38 = sphi 0, %s40
      %s41 = sphi 0, %s38
      %s42 = sphi 0, %s41
      %s58 = sphi 0, %s42
      %s62 = sphi 0, %s62
      %s64 = sphi 0, %s62
      %s65 = sphi 0, %s64
      %s79 = sphi 0, %s65
      %s87 = sphi 0, %s89
      %s90 = sphi 0, %s87
      %s91 = sphi 0, %s90
      %s107 = sphi 0, %s91
    $region4: #{tpu_custom_call.1} parent=1 // loop_header_branch
      %17 = sbr.rel (%p15) target = $region8
    $region5: #{tpu_custom_call.1} parent=1 // loop_body
      %s19 = ssub.s32 %s14, 1
      %s20 = ssub.s32 %s14, 2
      %s27 = sadd.s32 1, %s22
      %p28 = scmp.ge.s32.totalorder %s27, 2
      %s29 = scalar_select %p28, 0, %s27
      %s30 = sadd.s32 1, %s21
      %s31 = scalar_select %p28, %s30, %s21
      %p32 = scmp.ge.s32.totalorder %s31, 1
      %s33 = scalar_select %p32, 0, %s31
      %s34 = ssub.s32 %s22, %s29
      %s35 = ssub.s32 %s21, %s33
      %s36 = sor.u32 %s34, %s35
      %p37 = scmp.eq.s32.totalorder %s36, 0
      %s39 = sadd.s32 %s38, 1
      %s40 = scalar_select %p37, %s38, %s39
      %p43 = pneg %p37
      %p44 = scmp.eq.s32.totalorder %s14, 1
      %p45 = por %p43, %p44
      %p46 = scmp.ne.s32.totalorder %s38, %s41
      %p47 = scmp.eq.s32.totalorder %s14, 0
      %p48 = por %p46, %p47
      %p49 = scmp.ne.s32.totalorder %s38, %s41
      %p50 = scmp.eq.s32.totalorder %s19, 1
      %p51 = por %p49, %p50
      %p52 = scmp.ne.s32.totalorder %s41, %s42
      %p53 = scmp.eq.s32.totalorder %s19, 0
      %p54 = por %p52, %p53
      %p55 = scmp.ne.s32.totalorder %s41, %s42
      %p56 = scmp.eq.s32.totalorder %s20, 1
      %p57 = por %p55, %p56
      %p59 = scmp.ne.s32.totalorder %s42, %s58
      %p60 = scmp.eq.s32.totalorder %s20, 0
      %p61 = por %p59, %p60
      %s63 = sadd.s32 %s62, 1
      %p66 = scmp.eq.s32.totalorder %s14, 1
      %p67 = scmp.ne.s32.totalorder %s62, %s64
      %p68 = scmp.eq.s32.totalorder %s14, 0
      %p69 = por %p67, %p68
      %p70 = scmp.ne.s32.totalorder %s62, %s64
      %p71 = scmp.eq.s32.totalorder %s19, 1
      %p72 = por %p70, %p71
      %p73 = scmp.ne.s32.totalorder %s64, %s65
      %p74 = scmp.eq.s32.totalorder %s19, 0
      %p75 = por %p73, %p74
      %p76 = scmp.ne.s32.totalorder %s64, %s65
      %p77 = scmp.eq.s32.totalorder %s20, 1
      %p78 = por %p76, %p77
      %p80 = scmp.ne.s32.totalorder %s65, %s79
      %p81 = scmp.eq.s32.totalorder %s20, 0
      %p82 = por %p80, %p81
      %s83 = ssub.s32 %s22, %s29
      %s84 = ssub.s32 %s21, %s33
      %s85 = sor.u32 %s83, %s84
      %p86 = scmp.eq.s32.totalorder %s85, 0
      %s88 = sadd.s32 %s87, 1
      %s89 = scalar_select %p86, %s87, %s88
      %p92 = pneg %p86
      %p93 = scmp.eq.s32.totalorder %s14, 1
      %p94 = por %p92, %p93
      %p95 = scmp.ne.s32.totalorder %s87, %s90
      %p96 = scmp.eq.s32.totalorder %s14, 0
      %p97 = por %p95, %p96
      %p98 = scmp.ne.s32.totalorder %s87, %s90
      %p99 = scmp.eq.s32.totalorder %s19, 1
      %p100 = por %p98, %p99
      %p101 = scmp.ne.s32.totalorder %s90, %s91
      %p102 = scmp.eq.s32.totalorder %s19, 0
      %p103 = por %p101, %p102
      %p104 = scmp.ne.s32.totalorder %s90, %s91
      %p105 = scmp.eq.s32.totalorder %s20, 1
      %p106 = por %p104, %p105
      %p108 = scmp.ne.s32.totalorder %s91, %s107
      %p109 = scmp.eq.s32.totalorder %s20, 0
      %p110 = por %p108, %p109
      %p111 = scmp.le.s32.totalorder 1, %s14
      %p112 = scmp.lt.s32.totalorder %s14, 3
      %p113 = pnand %p111, %p112
      %p114 = pneg %p113
      // Predicated region
      $region9: #{tpu_custom_call.1} parent=5 // pred_check
        _
      $region10: #{tpu_custom_call.1} parent=5 // pred_check_branch
        %116 = sbr.rel (%p113) target = $region12
      $region11: #{tpu_custom_call.1} parent=5 // pred_region
        %s117 = ssub.s32 %s14, 1
        // Predicated region
        $region13: #{tpu_custom_call.1} parent=11 // pred_check
          %p118 = pneg %p75
        $region14: #{tpu_custom_call.1} parent=11 // pred_check_branch
          %120 = sbr.rel (%p118) target = $region16
        $region15: #{tpu_custom_call.1} parent=11 // pred_region
          _
        $region16: #{tpu_custom_call.1} parent=11 // pred_fallthru
          _
      $region12: #{tpu_custom_call.1} parent=5 // pred_fallthru
        _
      %p121 = scmp.lt.s32.totalorder %s14, 2
      // Predicated region
      $region17: #{tpu_custom_call.1} parent=5 // pred_check
        %p122 = pneg %p121
      $region18: #{tpu_custom_call.1} parent=5 // pred_check_branch
        %124 = sbr.rel (%p122) target = $region20
      $region19: #{tpu_custom_call.1} parent=5 // pred_region
        // Predicated region
        $region21: #{tpu_custom_call.1} parent=19 // pred_check
          %p125 = pneg %p48
        $region22: #{tpu_custom_call.1} parent=19 // pred_check_branch
          %127 = sbr.rel (%p125) target = $region24
        $region23: #{tpu_custom_call.1} parent=19 // pred_region
          %s128 = sand.u32 %s38, 1
          %s129 = scalar_lea.sflag [#allocation3], %s128
          %s130 = sand.u32 %s38, 1
          %s131 = smul.addr %s130, 8
          %s132 = scalar_lea.vmem [#allocation2], %s131
          %s133 = smul.u32 2, %s21
          %s135 = ssub.s32 128, 128
          %136 = vsyncadd %s129, %s135
          %s137 = smul.addr %s22, 2
          %s138 = sadd.s32 %s133, %s137
          %s139 = smul.addr %s138, 64
          %s140 = scalar_lea.hbm %s0, %s139
          %s142 = sshll.u32 %s132, 4
          %s143 = int_to_ptr.vmem [resolvable:$true] %s142
          %145 = dma.hbm_to_vmem [thread:$0]  %s140, 128, %s143, %s129
        $region24: #{tpu_custom_call.1} parent=19 // pred_fallthru
          _
      $region20: #{tpu_custom_call.1} parent=5 // pred_fallthru
        _
      %p146 = scmp.le.s32.totalorder 1, %s14
      %p147 = scmp.lt.s32.totalorder %s14, 3
      %p148 = pnand %p146, %p147
      %p149 = pneg %p148
      // Predicated region
      $region25: #{tpu_custom_call.1} parent=5 // pred_check
        _
      $region26: #{tpu_custom_call.1} parent=5 // pred_check_branch
        %151 = sbr.rel (%p148) target = $region28
      $region27: #{tpu_custom_call.1} parent=5 // pred_region
        %s152 = ssub.s32 %s14, 1
        %s153 = sand.u32 %s41, 1
        %s154 = scalar_lea.sflag [#allocation3], %s153
        %s155 = sand.u32 %s41, 1
        %s156 = smul.addr %s155, 8
        %s157 = scalar_lea.vmem [#allocation2], %s156
        // Predicated region
        $region29: #{tpu_custom_call.1} parent=27 // pred_check
          %p158 = pneg %p54
        $region30: #{tpu_custom_call.1} parent=27 // pred_check_branch
          %160 = sbr.rel (%p158) target = $region32
        $region31: #{tpu_custom_call.1} parent=27 // pred_region
          %161 = dma.done %s154, 128
        $region32: #{tpu_custom_call.1} parent=27 // pred_fallthru
          _
        %s162 = sand.u32 %s41, 1
        %s163 = scalar_lea.sflag [#allocation3], %s162
        %s164 = sand.u32 %s41, 1
        %s165 = smul.addr %s164, 8
        %s166 = scalar_lea.vmem [#allocation2], %s165
        %p167 = pneg %p54
        %p168 = pneg %p51
        %p169 = pneg %p75
        %p170 = pneg %p72
        %p171 = pneg %p103
        %p172 = pneg %p100
        %s173 = sand.u32 %s90, 1
        %s174 = scalar_lea.sflag [#allocation4], %s173
        %s175 = sand.u32 %s90, 1
        %s176 = smul.addr %s175, 16
        %s177 = scalar_lea.vmem [#allocation5], %s176
        %s178 = smul.u32 2, %s23
        %s179 = smul.u32 2, %s23
        %v180 = vld [vmem:[%s157] sm:$0xff]
        %v181 = vmax.f32 %v180, 0.0
        %v182 = vld [vmem:[%s1] sm:$0xff]
        %184 = vset.pattern.permute.xlu0 0
        %185 = vperm.xlu0 %184, %v182
        %v186 = vpop.permute.xlu0 %185
        %v189 = vlaneseq
        %v190 = vshrl.u32 %v189, 7
        %v191 = vsub.s32 0, %v190
        %v192 = vrot.slane %v181, %v191
        %v193 = vlaneseq
        %v194 = vshrl.u32 %v193, 7
        %v195 = vsub.s32 4, %v194
        %v196 = vrot.slane %v181, %v195
        %v199 = vlaneseq
        %v200 = vshrl.u32 %v199, 7
        %v201 = vsub.s32 0, %v200
        %v202 = vrot.slane %v192, %v201
        %v203 = vlaneseq
        %v204 = vshrl.u32 %v203, 7
        %v205 = vsub.s32 0, %v204
        %v206 = vrot.slane %v196, %v205
        %v207 = vmul.f32 %v186, %v202
        %v208 = vmul.f32 %v186, %v206
        %209 = vset.pattern.permute.xlu0 1
        %210 = vperm.xlu0 %209, %v182
        %v211 = vpop.permute.xlu0 %210
        %v213 = vlaneseq
        %v214 = vshrl.u32 %v213, 7
        %v215 = vsub.s32 1, %v214
        %v216 = vrot.slane %v181, %v215
        %v217 = vlaneseq
        %v218 = vshrl.u32 %v217, 7
        %v219 = vsub.s32 5, %v218
        %v220 = vrot.slane %v181, %v219
        %v223 = vlaneseq
        %v224 = vshrl.u32 %v223, 7
        %v225 = vsub.s32 1, %v224
        %v226 = vrot.slane %v216, %v225
        %v227 = vlaneseq
        %v228 = vshrl.u32 %v227, 7
        %v229 = vsub.s32 1, %v228
        %v230 = vrot.slane %v220, %v229
        %v231 = vmul.f32 %v211, %v226
        %v232 = vmul.f32 %v211, %v230
        %v233 = vadd.f32 %v207, %v231
        %v234 = vadd.f32 %v208, %v232
        %235 = vset.pattern.permute.xlu0 2
        %236 = vperm.xlu0 %235, %v182
        %v237 = vpop.permute.xlu0 %236
        %v239 = vlaneseq
        %v240 = vshrl.u32 %v239, 7
        %v241 = vsub.s32 2, %v240
        %v242 = vrot.slane %v181, %v241
        %v243 = vlaneseq
        %v244 = vshrl.u32 %v243, 7
        %v245 = vsub.s32 6, %v244
        %v246 = vrot.slane %v181, %v245
        %v249 = vlaneseq
        %v250 = vshrl.u32 %v249, 7
        %v251 = vsub.s32 2, %v250
        %v252 = vrot.slane %v242, %v251
        %v253 = vlaneseq
        %v254 = vshrl.u32 %v253, 7
        %v255 = vsub.s32 2, %v254
        %v256 = vrot.slane %v246, %v255
        %v257 = vmul.f32 %v237, %v252
        %v258 = vmul.f32 %v237, %v256
        %v259 = vadd.f32 %v233, %v257
        %v260 = vadd.f32 %v234, %v258
        %261 = vset.pattern.permute.xlu0 3
        %262 = vperm.xlu0 %261, %v182
        %v263 = vpop.permute.xlu0 %262
        %v265 = vlaneseq
        %v266 = vshrl.u32 %v265, 7
        %v267 = vsub.s32 3, %v266
        %v268 = vrot.slane %v181, %v267
        %v269 = vlaneseq
        %v270 = vshrl.u32 %v269, 7
        %v271 = vsub.s32 7, %v270
        %v272 = vrot.slane %v181, %v271
        %v275 = vlaneseq
        %v276 = vshrl.u32 %v275, 7
        %v277 = vsub.s32 3, %v276
        %v278 = vrot.slane %v268, %v277
        %v279 = vlaneseq
        %v280 = vshrl.u32 %v279, 7
        %v281 = vsub.s32 3, %v280
        %v282 = vrot.slane %v272, %v281
        %v283 = vmul.f32 %v263, %v278
        %v284 = vmul.f32 %v263, %v282
        %v285 = vadd.f32 %v259, %v283
        %v286 = vadd.f32 %v260, %v284
        %287 = vst [vmem:[%s177] sm:$0xff] %v285
        %288 = vst [vmem:[%s177 + $0x8] sm:$0xff] %v286
        %s289 = sand.u32 %s90, 1
        %s290 = scalar_lea.sflag [#allocation4], %s289
        %s291 = sand.u32 %s90, 1
        %s292 = smul.addr %s291, 16
        %s293 = scalar_lea.vmem [#allocation5], %s292
        // Predicated region
        $region33: #{tpu_custom_call.1} parent=27 // pred_check
          %p294 = pneg %p100
        $region34: #{tpu_custom_call.1} parent=27 // pred_check_branch
          %296 = sbr.rel (%p294) target = $region36
        $region35: #{tpu_custom_call.1} parent=27 // pred_region
          %s297 = smul.u32 2, %s23
          %s299 = ssub.s32 256, 256
          %300 = vsyncadd %s290, %s299
          %s301 = smul.addr %s24, 2
          %s302 = sadd.s32 %s297, %s301
          %s303 = smul.addr %s302, 128
          %s304 = scalar_lea.hbm %s2, %s303
          %s306 = sshll.u32 %s293, 4
          %s307 = int_to_ptr.vmem [resolvable:$true] %s306
          %309 = dma.vmem_to_hbm [thread:$0]  %s307, 256, %s304, %s290
        $region36: #{tpu_custom_call.1} parent=27 // pred_fallthru
          _
      $region28: #{tpu_custom_call.1} parent=5 // pred_fallthru
        _
      %p310 = scmp.le.s32.totalorder 2, %s14
      // Predicated region
      $region37: #{tpu_custom_call.1} parent=5 // pred_check
        %p311 = pneg %p310
      $region38: #{tpu_custom_call.1} parent=5 // pred_check_branch
        %313 = sbr.rel (%p311) target = $region40
      $region39: #{tpu_custom_call.1} parent=5 // pred_region
        %s314 = ssub.s32 %s14, 2
        // Predicated region
        $region41: #{tpu_custom_call.1} parent=39 // pred_check
          %p315 = pneg %p106
        $region42: #{tpu_custom_call.1} parent=39 // pred_check_branch
          %317 = sbr.rel (%p315) target = $region44
        $region43: #{tpu_custom_call.1} parent=39 // pred_region
          %s318 = sand.u32 %s91, 1
          %s319 = scalar_lea.sflag [#allocation4], %s318
          %s320 = sand.u32 %s91, 1
          %s321 = smul.addr %s320, 16
          %s322 = scalar_lea.vmem [#allocation5], %s321
          %323 = dma.done %s319, 256
        $region44: #{tpu_custom_call.1} parent=39 // pred_fallthru
          _
      $region40: #{tpu_custom_call.1} parent=5 // pred_fallthru
        _
    $region6: #{tpu_custom_call.1} parent=1 // loop_footer
      %s18 = sadd.s32 1, %s14
    $region7: #{tpu_custom_call.1} parent=1 // loop_footer_branch
      %13 = sbr.rel target = $region3
    $region8: #{tpu_custom_call.1} parent=1 // loop_exit
      _
    %324 = vsyncpa [#allocation3], 1
    %s325 = scalar_lea.sflag [#allocation3], 1
    %326 = vsyncpa %s325, 1
    %327 = vsyncpa [#allocation4], 1
    %s328 = scalar_lea.sflag [#allocation4], 1
    %329 = vsyncpa %s328, 1

</llo_original>
